<compile_context>
chip_gen: v6e
topology: v6e:2x2x1
jax: 0.10.0
libtpu: 0.0.40
codegen_flags: <defaults>
</compile_context>

<pallas_src>
import jax
import jax.numpy as jnp
from jax.experimental import pallas as pl
from jax.experimental.pallas import tpu as pltpu

ALPHA = 1.0
GAMMA = 2.0
LANE = 128
SUBLANE = 8
MAX_TILE_ROWS = 4096   # (4096,128) f32 = 2 MiB/input/block; 2 inputs x 2 bufs = 8 MiB VMEM

_NUM_CORES = None


def _ceil_to(x, m):
    return -(-x // m) * m


def _num_tensorcores():
    """Best-effort TensorCores-per-chip (v7x=2, v5e/v6e=1); defaults to 1."""
    global _NUM_CORES
    if _NUM_CORES is None:
        n = 1
        try:
            info = pltpu.get_tpu_info()
            for name in ("num_cores", "core_count", "num_tensorcores", "num_cores_per_chip"):
                v = getattr(info, name, None)
                if isinstance(v, int) and 1 <= v <= 8:
                    n = v
                    break
        except Exception:
            n = 1
        _NUM_CORES = n
    return _NUM_CORES


def _make_kernel(*, rows, tile_rows, tiles_per_split, needs_mask, hard_labels):
    """Accumulate per-(sublane, lane) partial sums of the UN-negated per-element
    log-likelihood  t*log(p) + (1-t)*log(1-p)  into a resident (1, 8, 128) f32
    output block.  Negation / mean / focal transform happen in the wrapper."""

    def kernel(p_ref, t_ref, o_ref):
        @pl.when(pl.program_id(1) == 0)
        def _():
            o_ref[...] = jnp.zeros_like(o_ref)

        p = p_ref[...].astype(jnp.float32)
        t = t_ref[...].astype(jnp.float32)

        # PyTorch's binary_cross_entropy clamps each log term at -100; the clamp
        # is applied before any multiply/select so garbage lanes can't make NaN
        # leak into kept lanes.
        if hard_labels:
            # Hard 0/1 labels: one EUP log per element instead of two.
            x = jnp.where(t > 0.5, p, 1.0 - p)
            ll = jnp.maximum(jnp.log(x), -100.0)
        else:
            # NOTE: recent torch uses log1p(-p) for the second term; jnp.log(1-p)
            # is kept here for guaranteed Mosaic lowering (differs only for p~1).
            log_p = jnp.maximum(jnp.log(p), -100.0)
            log_1mp = jnp.maximum(jnp.log(1.0 - p), -100.0)
            # Algebraic form: one fewer VPU multiply than t*log_p + (1-t)*log_1mp.
            ll = log_1mp + t * (log_p - log_1mp)

        if needs_mask:
            # Zero the garbage region of the last (partially out-of-bounds)
            # block; `rows` is a trace-time constant baked into the kernel.
            g = pl.program_id(0) * tiles_per_split + pl.program_id(1)
            valid = rows - g * tile_rows
            row_id = jax.lax.broadcasted_iota(jnp.int32, (tile_rows, LANE), 0)
            ll = jnp.where(row_id < valid, ll, 0.0)

        # Pure-VPU partial reduction onto one (8, 128) vreg; the single
        # cross-lane reduce to a scalar happens once in the wrapper.
        partial = ll.reshape(tile_rows // SUBLANE, SUBLANE, LANE).sum(axis=0)
        o_ref[...] += partial[None, :, :]

    return kernel


def _signed_ll_sum_jax(p, t, hard_labels):
    """Plain-JAX sum of t*log(p)+(1-t)*log(1-p) for tiny tails / small inputs."""
    p = p.astype(jnp.float32)
    t = t.astype(jnp.float32)
    if hard_labels:
        return jnp.sum(jnp.maximum(jnp.log(jnp.where(t > 0.5, p, 1.0 - p)), -100.0))
    log_p = jnp.maximum(jnp.log(p), -100.0)
    log_1mp = jnp.maximum(jnp.log(1.0 - p), -100.0)
    return jnp.sum(log_1mp + t * (log_p - log_1mp))


def _focal_from_signed_sum(signed_sum, total, alpha, gamma):
    mean_bce = -signed_sum / jnp.float32(total)
    pt = jnp.exp(-mean_bce)
    one_m_pt = 1.0 - pt
    focal = one_m_pt * one_m_pt if gamma == 2 else one_m_pt ** gamma
    return (alpha * focal * mean_bce).astype(jnp.float32).reshape(())


def binary_focal_loss(inputs, targets, *, alpha=ALPHA, gamma=GAMMA, hard_labels=False):
    """Forward pass of BinaryFocalLoss with the default config (logits=False,
    reduce=True).  `hard_labels=True` is an opt-in fast path (half the EUP
    work, relevant on v7x) valid only when every target is exactly 0.0 or 1.0."""
    # TODO(synk): non-default ctor args (weight, logits=True, reduce=False) are not implemented.
    assert inputs.shape == targets.shape
    total = inputs.size
    assert total > 0

    flat_p = inputs.reshape(-1)
    flat_t = targets.reshape(-1)

    rows = total // LANE            # number of full 128-lane rows
    rem = total - rows * LANE       # <128 leftover elements

    if rows < SUBLANE:
        # Fewer than 1024 elements: not worth a kernel launch.
        return _focal_from_signed_sum(
            _signed_ll_sum_jax(flat_p, flat_t, hard_labels), total, alpha, gamma)

    main = rows * LANE
    if rem:
        # Only the <128-element lane remainder is handled outside the kernel;
        # no full-array jnp.pad.  (The prefix slice is at worst one copy and
        # only for totals not divisible by 128.)
        p_main = jax.lax.slice(flat_p, (0,), (main,))
        t_main = jax.lax.slice(flat_t, (0,), (main,))
        tail_sum = _signed_ll_sum_jax(flat_p[main:], flat_t[main:], hard_labels)
    else:
        p_main, t_main = flat_p, flat_t          # reshape below is a free bitcast
        tail_sum = jnp.float32(0.0)

    # Streamed in the caller's dtype (no wrapper cast); kernel upcasts per tile.
    p2d = p_main.reshape(rows, LANE)
    t2d = t_main.reshape(rows, LANE)

    # Tiling: largest sublane-aligned tile <= MAX_TILE_ROWS, balanced across
    # blocks so masked/garbage work is at most ~8 rows per block.
    if rows <= MAX_TILE_ROWS:
        tile_rows = (rows // SUBLANE) * SUBLANE
    else:
        nb0 = -(-rows // MAX_TILE_ROWS)
        tile_rows = _ceil_to(-(-rows // nb0), SUBLANE)
    num_blocks = -(-rows // tile_rows)

    # v7x: shard the streaming over both TensorCores; 1 elsewhere.
    n_cores = _num_tensorcores()
    num_splits = n_cores if (n_cores > 1 and num_blocks >= n_cores) else 1

    def run(num_splits):
        tiles_per_split = -(-num_blocks // num_splits)
        total_blocks = num_splits * tiles_per_split
        needs_mask = total_blocks * tile_rows != rows
        clamp_blocks = total_blocks > num_blocks   # uneven block count across splits

        def blk(s, i):
            g = s * tiles_per_split + i
            if clamp_blocks:
                # Keep every DMA window anchored in-bounds; duplicated blocks
                # contribute exactly zero because the kernel masks them fully.
                g = jnp.minimum(g, num_blocks - 1)
            return (g, 0)

        kernel = _make_kernel(rows=rows, tile_rows=tile_rows,
                              tiles_per_split=tiles_per_split,
                              needs_mask=needs_mask, hard_labels=hard_labels)

        in_bytes = rows * LANE * (p2d.dtype.itemsize + t2d.dtype.itemsize)
        cost = pl.CostEstimate(
            flops=6 * rows * LANE,
            transcendentals=(1 if hard_labels else 2) * rows * LANE,
            bytes_accessed=in_bytes + num_splits * SUBLANE * LANE * 4,
        )

        if num_splits > 1:
            sem = (pltpu.CORE_PARALLEL, pltpu.ARBITRARY)
        else:
            sem = ("arbitrary", "arbitrary")

        return pl.pallas_call(
            kernel,
            out_shape=jax.ShapeDtypeStruct((num_splits, SUBLANE, LANE), jnp.float32),
            grid_spec=pltpu.PrefetchScalarGridSpec(
                num_scalar_prefetch=0,
                grid=(num_splits, tiles_per_split),
                in_specs=[
                    pl.BlockSpec((tile_rows, LANE), blk),
                    pl.BlockSpec((tile_rows, LANE), blk),
                ],
                # Each split owns exactly one resident accumulator block.
                out_specs=pl.BlockSpec((1, SUBLANE, LANE), lambda s, i: (s, 0, 0)),
            ),
            compiler_params=pltpu.CompilerParams(dimension_semantics=sem),
            cost_estimate=cost,
        )(p2d, t2d)

    try:
        partials = run(num_splits)
    except Exception:
        if num_splits == 1:
            raise
        partials = run(1)   # safe fallback if the multi-core split fails to lower

    signed_sum = jnp.sum(partials) + tail_sum
    return _focal_from_signed_sum(signed_sum, total, alpha, gamma)


def _reference(inputs, targets, alpha=ALPHA, gamma=GAMMA):
    p = inputs.astype(jnp.float32)
    t = targets.astype(jnp.float32)
    log_p = jnp.maximum(jnp.log(p), -100.0)
    log_1mp = jnp.maximum(jnp.log(1.0 - p), -100.0)
    bce = jnp.mean(-(t * log_p + (1.0 - t) * log_1mp))
    pt = jnp.exp(-bce)
    return alpha * (1.0 - pt) ** gamma * bce


if __name__ == "__main__":
    key = jax.random.PRNGKey(0)
    k1, k2, k3, k4 = jax.random.split(key, 4)

    # NCHW inputs, probabilities in (0, 1) (logits=False branch).
    x_shape = (2, 4, 16, 16)
    inputs = jax.nn.sigmoid(jax.random.normal(k1, x_shape, dtype=jnp.float32))
    targets = jax.random.bernoulli(k2, p=0.5, shape=x_shape).astype(jnp.float32)

    loss = binary_focal_loss(inputs, targets)
    jax.block_until_ready(loss)
    ref = _reference(inputs, targets)
    assert jnp.allclose(loss, ref, rtol=1e-5, atol=1e-6), (loss, ref)

    # Opt-in hard-label fast path (valid here: targets are exact 0/1 labels).
    loss_hard = binary_focal_loss(inputs, targets, hard_labels=True)
    jax.block_until_ready(loss_hard)
    assert jnp.allclose(loss_hard, ref, rtol=1e-5, atol=1e-6), (loss_hard, ref)

    # Non-128-aligned shape: exercises the masked ragged tile + JAX lane tail.
    y_shape = (3, 5, 13, 7)   # 1365 elements = 10 full 128-lane rows + 85 tail
    inputs2 = jax.nn.sigmoid(jax.random.normal(k3, y_shape, dtype=jnp.float32))
    targets2 = jax.random.bernoulli(k4, p=0.5, shape=y_shape).astype(jnp.float32)
    loss2 = binary_focal_loss(inputs2, targets2)
    jax.block_until_ready(loss2)
    ref2 = _reference(inputs2, targets2)
    assert jnp.allclose(loss2, ref2, rtol=1e-5, atol=1e-6), (loss2, ref2)

    print("KERNEL_OK")
</pallas_src>

<mosaic_0001>
module attributes {stable_mosaic.version = 11 : i64} {
  func.func @kernel(%arg0: i32, %arg1: i32, %arg2: memref<16x128xf32, #tpu.memory_space<vmem>>, %arg3: memref<16x128xf32, #tpu.memory_space<vmem>>, %arg4: memref<1x8x128xf32, #tpu.memory_space<vmem>>) attributes {dimension_semantics = [#tpu.dimension_semantics<arbitrary>, #tpu.dimension_semantics<arbitrary>], iteration_bounds = array<i64: 1, 1>, scalar_prefetch = 0 : i64, scratch_operands = 0 : i64, tpu.core_type = #tpu.core_type<tc>, window_params = [{transform_indices = @transform_0, window_bounds = array<i64: 16, 128>}, {transform_indices = @transform_1, window_bounds = array<i64: 16, 128>}, {transform_indices = @transform_2, window_bounds = array<i64: 1, 8, 128>}]} {
    %c0_i32 = arith.constant 0 : i32
    %0 = arith.cmpi eq, %arg1, %c0_i32 : i32
    %1 = arith.extui %0 : i1 to i32
    %c0_i32_0 = arith.constant 0 : i32
    %2 = arith.cmpi ne, %1, %c0_i32_0 : i32
    scf.if %2 {
      %cst_13 = arith.constant 0.000000e+00 : f32
      %22 = vector.broadcast %cst_13 : f32 to vector<1x8x128xf32>
      %c0_14 = arith.constant 0 : index
      %c0_15 = arith.constant 0 : index
      %c0_16 = arith.constant 0 : index
      %23 = vector.load %arg4[%c0_14, %c0_15, %c0_16] : memref<1x8x128xf32, #tpu.memory_space<vmem>>, vector<1x8x128xf32>
      tpu.vector_store %arg4[%c0_14, %c0_15, %c0_16], %22 {strides = array<i32>} : memref<1x8x128xf32, #tpu.memory_space<vmem>>, vector<1x8x128xf32>,
    } else {
    }
    %c0 = arith.constant 0 : index
    %c0_1 = arith.constant 0 : index
    %3 = vector.load %arg2[%c0, %c0_1] : memref<16x128xf32, #tpu.memory_space<vmem>>, vector<16x128xf32>
    %c0_2 = arith.constant 0 : index
    %c0_3 = arith.constant 0 : index
    %4 = vector.load %arg3[%c0_2, %c0_3] : memref<16x128xf32, #tpu.memory_space<vmem>>, vector<16x128xf32>
    %5 = math.log %3 : vector<16x128xf32>
    %cst = arith.constant -1.000000e+02 : f32
    %6 = vector.broadcast %cst : f32 to vector<16x128xf32>
    %7 = arith.maximumf %5, %6 : vector<16x128xf32>
    %cst_4 = arith.constant 1.000000e+00 : f32
    %8 = vector.broadcast %cst_4 : f32 to vector<16x128xf32>
    %9 = arith.subf %8, %3 : vector<16x128xf32>
    %10 = math.log %9 : vector<16x128xf32>
    %cst_5 = arith.constant -1.000000e+02 : f32
    %11 = vector.broadcast %cst_5 : f32 to vector<16x128xf32>
    %12 = arith.maximumf %10, %11 : vector<16x128xf32>
    %13 = arith.subf %7, %12 : vector<16x128xf32>
    %14 = arith.mulf %4, %13 : vector<16x128xf32>
    %15 = arith.addf %12, %14 : vector<16x128xf32>
    %16 = vector.shape_cast %15 : vector<16x128xf32> to vector<2x8x128xf32>
    %cst_6 = arith.constant dense<0.000000e+00> : vector<8x128xf32>
    %17 = vector.multi_reduction <add>, %16, %cst_6 [0] : vector<2x8x128xf32> to vector<8x128xf32>
    %c0_7 = arith.constant 0 : index
    %c0_8 = arith.constant 0 : index
    %c0_9 = arith.constant 0 : index
    %18 = vector.load %arg4[%c0_7, %c0_8, %c0_9] : memref<1x8x128xf32, #tpu.memory_space<vmem>>, vector<1x8x128xf32>
    %19 = vector.shape_cast %17 : vector<8x128xf32> to vector<1x8x128xf32>
    %20 = arith.addf %18, %19 : vector<1x8x128xf32>
    %c0_10 = arith.constant 0 : index
    %c0_11 = arith.constant 0 : index
    %c0_12 = arith.constant 0 : index
    %21 = vector.load %arg4[%c0_10, %c0_11, %c0_12] : memref<1x8x128xf32, #tpu.memory_space<vmem>>, vector<1x8x128xf32>
    tpu.vector_store %arg4[%c0_10, %c0_11, %c0_12], %20 {strides = array<i32>} : memref<1x8x128xf32, #tpu.memory_space<vmem>>, vector<1x8x128xf32>,
    return
  }
  func.func @transform_0(%arg0: i32, %arg1: i32) -> (i32, i32) {
    %c1_i32 = arith.constant 1 : i32
    %0 = arith.muli %arg0, %c1_i32 : i32
    %1 = arith.addi %0, %arg1 : i32
    %c0_i32 = arith.constant 0 : i32
    %c0_i32_0 = arith.constant 0 : i32
    return %1, %c0_i32 : i32, i32
  }
  func.func @transform_1(%arg0: i32, %arg1: i32) -> (i32, i32) {
    %c1_i32 = arith.constant 1 : i32
    %0 = arith.muli %arg0, %c1_i32 : i32
    %1 = arith.addi %0, %arg1 : i32
    %c0_i32 = arith.constant 0 : i32
    %c0_i32_0 = arith.constant 0 : i32
    return %1, %c0_i32 : i32, i32
  }
  func.func @transform_2(%arg0: i32, %arg1: i32) -> (i32, i32, i32) {
    %c0_i32 = arith.constant 0 : i32
    %c0_i32_0 = arith.constant 0 : i32
    %c0_i32_1 = arith.constant 0 : i32
    return %arg0, %c0_i32, %c0_i32_0 : i32, i32, i32
  }
}

</mosaic_0001>

<llo_original>
// kernel: tpu_custom_call.1
$region0: #{tpu_custom_call.1}
  #allocation0 [shape = 'u32[]', space=smem, size = 0x4, offset = 0x4, fixed_abs, tag = 'smem constant byte address 0x4 - core index']
  #allocation1 [shape = 'u32[144,128]{1,0:T(1,128)}', space=vmem, size = 0x12000, scoped, tag = 'internal scratch']
  %s0 = inlined_call_operand.hbm [shape: f32[16,128], index: 0, kind: input, shape index: {}]
  %s1 = inlined_call_operand.hbm [shape: f32[16,128], index: 1, kind: input, shape index: {}]
  %s2 = inlined_call_operand.hbm [shape: f32[1,8,128], index: 2, kind: output, shape index: {}]
  %s3 = sld [smem:[#allocation0]]
  $region30: #{tpu_custom_call.1} parent=0
    _
  %s5 = ssub.s32 1, %s3
  %s6 = scalar_select 0, %s5, %s3
  $region1: #{tpu_custom_call.1} parent=0
    #allocation2 [shape = 'u8[8192]{0}', space=vmem, size = 0x2000, scoped, tag = 'input window, operand 0, single buffered']
    #allocation3 [shape = 's32[1]{0}', space=sflag, size = 0x4, scoped, tag = 'scoped memory for tpu_custom_call.1']
    #allocation4 [shape = 's32[1]{0}', space=sflag, size = 0x4, scoped, tag = 'scoped memory for tpu_custom_call.1']
    #allocation5 [shape = 'u8[8192]{0}', space=vmem, size = 0x2000, scoped, tag = 'input window, operand 1, single buffered']
    #allocation6 [shape = 's32[1]{0}', space=sflag, size = 0x4, scoped, tag = 'scoped memory for tpu_custom_call.1']
    #allocation7 [shape = 'u8[4096]{0}', space=vmem, size = 0x1000, scoped, tag = 'output window, operand 0, single buffered']
    %7 = vsyncpa [#allocation3], 0
    %8 = vsyncpa [#allocation6], 0
    %9 = vsyncpa [#allocation4], 0
    // Predicated region
    $region2: #{tpu_custom_call.1} parent=1 // pred_check
      _
    $region3: #{tpu_custom_call.1} parent=1 // pred_check_branch
      %11 = sbr.rel (0) target = $region5
    $region4: #{tpu_custom_call.1} parent=1 // pred_region
      %s12 = sadd.s32 0, 0
      %s13 = smul.u32 2, %s12
      %s15 = ssub.s32 256, 256
      %16 = vsyncadd [#allocation3], %s15
      %s17 = smul.addr %s13, 128
      %s18 = scalar_lea.hbm %s0, %s17
      %s19 = sshll.u32 [#allocation2], 4
      %s20 = int_to_ptr.vmem [resolvable:$true] %s19
      %25 = dma.hbm_to_vmem [thread:$0]  %s18, 256, %s20, [#allocation3], 128, 128, 8
    $region5: #{tpu_custom_call.1} parent=1 // pred_fallthru
      _
    // Predicated region
    $region6: #{tpu_custom_call.1} parent=1 // pred_check
      _
    $region7: #{tpu_custom_call.1} parent=1 // pred_check_branch
      %27 = sbr.rel (0) target = $region9
    $region8: #{tpu_custom_call.1} parent=1 // pred_region
      %s28 = sadd.s32 0, 0
      %s29 = smul.u32 2, %s28
      %s31 = ssub.s32 256, 256
      %32 = vsyncadd [#allocation6], %s31
      %s33 = smul.addr %s29, 128
      %s34 = scalar_lea.hbm %s1, %s33
      %s35 = sshll.u32 [#allocation5], 4
      %s36 = int_to_ptr.vmem [resolvable:$true] %s35
      %41 = dma.hbm_to_vmem [thread:$0]  %s34, 256, %s36, [#allocation6], 128, 128, 8
    $region9: #{tpu_custom_call.1} parent=1 // pred_fallthru
      _
    // Predicated region
    $region10: #{tpu_custom_call.1} parent=1 // pred_check
      _
    $region11: #{tpu_custom_call.1} parent=1 // pred_check_branch
      %43 = sbr.rel (0) target = $region13
    $region12: #{tpu_custom_call.1} parent=1 // pred_region
      %44 = dma.done [#allocation3], 256
    $region13: #{tpu_custom_call.1} parent=1 // pred_fallthru
      _
    // Predicated region
    $region14: #{tpu_custom_call.1} parent=1 // pred_check
      _
    $region15: #{tpu_custom_call.1} parent=1 // pred_check_branch
      %46 = sbr.rel (0) target = $region17
    $region16: #{tpu_custom_call.1} parent=1 // pred_region
      %47 = dma.done [#allocation6], 256
    $region17: #{tpu_custom_call.1} parent=1 // pred_fallthru
      _
    %s48 = sadd.s32 0, 0
    %s49 = smul.u32 2, %s48
    %s50 = sadd.s32 0, 0
    %s51 = smul.u32 2, %s50
    %p52 = scmp.eq.s32.totalorder 0, 0
    // Predicated region
    $region18: #{tpu_custom_call.1} parent=1 // pred_check
      %p53 = pneg %p52
    $region19: #{tpu_custom_call.1} parent=1 // pred_check_branch
      %55 = sbr.rel (%p53) target = $region21
    $region20: #{tpu_custom_call.1} parent=1 // pred_region
      %56 = vst [vmem:[#allocation7] sm:$0xff] 0.0
    $region21: #{tpu_custom_call.1} parent=1 // pred_fallthru
      _
    %v57 = vld [vmem:[#allocation2] sm:$0xff]
    %v58 = vld [vmem:[#allocation2 + $0x8] sm:$0xff]
    %v59 = vld [vmem:[#allocation5] sm:$0xff]
    %v60 = vld [vmem:[#allocation5 + $0x8] sm:$0xff]
    %v61 = vlog2.pop %v57
    %v62 = vmul.f32 %v61, 0.6931472
    %v63 = vlog2.pop %v58
    %v64 = vmul.f32 %v63, 0.6931472
    %v65 = vmax.f32 %v62, -100.0
    %v66 = vmax.f32 %v64, -100.0
    %v67 = vsub.f32 1.0, %v57
    %v68 = vsub.f32 1.0, %v58
    %v69 = vlog2.pop %v67
    %v70 = vmul.f32 %v69, 0.6931472
    %v71 = vlog2.pop %v68
    %v72 = vmul.f32 %v71, 0.6931472
    %v73 = vmax.f32 %v70, -100.0
    %v74 = vmax.f32 %v72, -100.0
    %v75 = vsub.f32 %v65, %v73
    %v76 = vsub.f32 %v66, %v74
    %v77 = vmul.f32 %v59, %v75
    %v78 = vmul.f32 %v60, %v76
    %v79 = vadd.f32 %v73, %v77
    %v80 = vadd.f32 %v74, %v78
    %v81 = vadd.f32 %v79, %v80
    %v82 = vld [vmem:[#allocation7] sm:$0xff]
    %v83 = vadd.f32 %v82, %v81
    %84 = vst [vmem:[#allocation7] sm:$0xff] %v83
    // Predicated region
    $region22: #{tpu_custom_call.1} parent=1 // pred_check
      _
    $region23: #{tpu_custom_call.1} parent=1 // pred_check_branch
      %86 = sbr.rel (0) target = $region25
    $region24: #{tpu_custom_call.1} parent=1 // pred_region
      %s88 = ssub.s32 128, 128
      %89 = vsyncadd [#allocation4], %s88
      %s91 = sshll.u32 [#allocation7], 4
      %s92 = int_to_ptr.vmem [resolvable:$true] %s91
      %94 = dma.vmem_to_hbm [thread:$0]  %s92, 128, %s2, [#allocation4]
    $region25: #{tpu_custom_call.1} parent=1 // pred_fallthru
      _
    // Predicated region
    $region26: #{tpu_custom_call.1} parent=1 // pred_check
      _
    $region27: #{tpu_custom_call.1} parent=1 // pred_check_branch
      %96 = sbr.rel (0) target = $region29
    $region28: #{tpu_custom_call.1} parent=1 // pred_region
      %97 = dma.done [#allocation4], 128
    $region29: #{tpu_custom_call.1} parent=1 // pred_fallthru
      _
    %98 = vsyncpa [#allocation3], 1
    %99 = vsyncpa [#allocation6], 1
    %100 = vsyncpa [#allocation4], 1

</llo_original>
